<compile_context>
chip_gen: v6e
topology: v6e:2x2x1
jax: 0.10.0
libtpu: 0.0.40
codegen_flags: <defaults>
</compile_context>

<pallas_src>
import functools

import jax
import jax.numpy as jnp
from jax import lax
from jax.experimental import pallas as pl
from jax.experimental.pallas import tpu as pltpu

LANES = 128
SUBLANES = 8


def _round_up(x, m):
    return ((x + m - 1) // m) * m


@functools.lru_cache(maxsize=None)
def _roll_shift_sign():
    """Probe pltpu.roll's rotation direction once per process.

    Returns +1 if pltpu.roll matches jnp.roll (out[i] = in[i - shift]); -1 if
    it is the opposite rotation.  The segmented prefix sum always needs values
    from *lower* lanes, so the kernel picks the shift amount accordingly.
    """
    def k(x_ref, o_ref):
        o_ref[...] = pltpu.roll(x_ref[...], 1, axis=1)

    x = jnp.broadcast_to(jnp.arange(LANES, dtype=jnp.float32), (SUBLANES, LANES))
    y = pl.pallas_call(
        k, out_shape=jax.ShapeDtypeStruct((SUBLANES, LANES), jnp.float32))(x)
    return 1 if int(y[0, 1]) == 0 else -1


def _ordinal_loss_kernel(pred_ref, code_ref, out_ref, *, kp, chunk_rows, roll_sign):
    # pred_ref: (TM, 128) probabilities (f32/bf16), interleaved: each group of
    #           `kp` consecutive lanes = the kp categories of one (b,s) element.
    # code_ref: (TM, 128) int8 op codes: 1 -> log(cum), 0 -> log(1-cum), 2 -> skip.
    # out_ref:  (8, 128)  f32 per-tile partial loss sums.
    rc = chunk_rows
    tm = code_ref.shape[0]

    eps = jnp.float32(1e-8)
    # NOTE: float32(1 - 1e-8) rounds to exactly 1.0; this mirrors the PyTorch
    # module's torch.clamp(max=1-1e-8) behaviour on float32 tensors.
    one_minus_eps = jnp.float32(1.0 - 1e-8)

    # Constant masks for the segmented (per kp-lane group) inclusive prefix
    # sum, hoisted out of the chunk loop (JAX does not CSE broadcasts).
    scan_steps = []
    if kp > 1:
        lane_in_grp = lax.broadcasted_iota(jnp.int32, (rc, LANES), 1) & (kp - 1)
        s = 1
        while s < kp:
            amt = s if roll_sign == 1 else LANES - s
            scan_steps.append((lane_in_grp >= s, amt))
            s *= 2

    def chunk_body(c, part):
        start = pl.multiple_of(c * rc, rc)
        x = pred_ref[pl.ds(start, rc), :].astype(jnp.float32)
        code = code_ref[pl.ds(start, rc), :].astype(jnp.int32)

        # Segmented inclusive prefix sum within each kp-lane group:
        #   cum[lane e*kp + k] = sum_{j <= k} p[e, j]
        # Rolls run on the XLU (otherwise idle slot); lanes that would pull
        # data from a neighbouring group are masked off.
        cum = x
        for mask, amt in scan_steps:
            cum = cum + jnp.where(mask, pltpu.roll(cum, amt, axis=1), 0.0)

        cp = jnp.clip(cum, eps, one_minus_eps)
        sel = jnp.where(code == 1, cp, 1.0 - cp)   # tgt<=k -> P(Y<=k), else 1-P
        sel = jnp.where(code < 2, sel, 1.0)        # k>=K-1 / padding -> log(1)=0
        term = jnp.log(sel)                        # EUP slot

        # Fold (rc, 128) -> (8, 128): the reshape splits whole (8,128) native
        # tiles (free view); the reduce is plain vreg adds over the lead axis.
        return part - jnp.sum(term.reshape(rc // SUBLANES, SUBLANES, LANES), axis=0)

    trips = tm // rc
    part = lax.fori_loop(0, trips, chunk_body,
                         jnp.zeros((SUBLANES, LANES), jnp.float32),
                         unroll=min(2, trips))
    out_ref[...] = part


@functools.partial(
    jax.jit, static_argnames=("reduction", "block_rows", "chunk_rows", "roll_sign"))
def _ordinal_loss_impl(predictions, targets, *, reduction, block_rows, chunk_rows,
                       roll_sign):
    B, S, K = predictions.shape
    N = B * S
    if K > LANES:
        raise NotImplementedError("n_cats > 128 not supported")

    # kp = smallest power of two >= K, so kp | 128 and the kp categories of an
    # element occupy kp consecutive lanes of the flat interleaved layout.
    kp = 1
    while kp < K:
        kp *= 2

    pdtype = jnp.bfloat16 if predictions.dtype == jnp.bfloat16 else jnp.float32
    pred = predictions.astype(pdtype)
    if kp != K:
        # TODO(synk): only hit when n_cats is not a power of two; producers that
        # emit a power-of-two category axis make the layout below a free reshape.
        pred = jnp.pad(pred, ((0, 0), (0, 0), (0, kp - K)))

    nk = N * kp
    R = pl.cdiv(nk, LANES)                 # rows of the (row, lane) element grid

    # Tile geometry: `tm` rows per grid step, `rc` rows per in-kernel chunk.
    # 32-row granularity keeps the int8 code blocks aligned to the packed
    # (32, 128) tile; tm is sized so grid >= 2 when possible (v7x: 2 TCs).
    tm = min(max(32, _round_up(block_rows, 32)),
             max(32, _round_up(pl.cdiv(R, 2), 32)))
    rc = max(32, (min(chunk_rows, tm) // 32) * 32)
    tm = _round_up(tm, rc)
    grid = pl.cdiv(R, tm)
    rpad = grid * tm

    itemsize = jnp.dtype(pdtype).itemsize
    # Predictions: (B,S,Kp) -> flat interleaved (N*kp,) is a FREE reshape (no
    # transpose, no extra HBM pass).  Only pad (one copy pass) when the lane
    # tail is ragged or the array is small; large lane-aligned inputs go
    # straight to the kernel with a partial last block (garbage rows there are
    # op-coded 2 and contribute exactly 0).
    flat = pred.reshape(nk)
    big = R * LANES * itemsize > (8 << 20)
    Rp = R if (nk == R * LANES and R >= tm and big) else rpad
    if Rp * LANES != nk:
        flat = jnp.pad(flat, (0, Rp * LANES - nk))
    pred2 = flat.reshape(Rp, LANES)

    # Per-lane int8 op codes: 1 -> log(cum), 0 -> log(1-cum), 2 -> skip.
    # Skip codes cover k >= K-1 lanes and every padded lane/row, so the kernel
    # needs no iota-based validity mask.  int8 keeps the target stream at
    # ~kp bytes/element of HBM traffic.
    k_idx = jnp.arange(kp, dtype=jnp.int32)[None, :]
    code = jnp.where(k_idx > K - 2, jnp.int8(2),
                     (targets.reshape(N, 1).astype(jnp.int32) <= k_idx)
                     .astype(jnp.int8))
    code = jnp.pad(code.reshape(nk), (0, rpad * LANES - nk), constant_values=2)
    code2 = code.reshape(rpad, LANES)

    kernel = functools.partial(_ordinal_loss_kernel, kp=kp, chunk_rows=rc,
                               roll_sign=roll_sign)

    # VMEM budget as a formula: double-buffered pred + code tiles plus headroom.
    blk_bytes = tm * LANES * (itemsize + 1)
    vmem_limit = int(min(max(4 * blk_bytes + (8 << 20), 32 << 20), 100 << 20))

    out = pl.pallas_call(
        kernel,
        out_shape=jax.ShapeDtypeStruct((grid * SUBLANES, LANES), jnp.float32),
        grid_spec=pltpu.PrefetchScalarGridSpec(
            num_scalar_prefetch=0,
            grid=(grid,),
            in_specs=[
                pl.BlockSpec((tm, LANES), lambda i: (i, 0)),
                pl.BlockSpec((tm, LANES), lambda i: (i, 0)),
            ],
            out_specs=pl.BlockSpec((SUBLANES, LANES), lambda i: (i, 0)),
        ),
        compiler_params=pltpu.CompilerParams(
            dimension_semantics=("parallel",),   # per-tile partials -> megacore safe
            vmem_limit_bytes=vmem_limit),
    )(pred2, code2)

    total = jnp.sum(out)                          # epilogue reduce of partials
    if reduction == "mean":
        return total / jnp.float32(N)
    elif reduction == "sum":
        return total
    else:
        # TODO(synk): reduction='none' (per-(B,S) loss map) not emitted by this
        # partial-sum kernel; mean/sum cover the module defaults.
        raise NotImplementedError("reduction='none' not implemented")


def ordinal_loss(predictions, targets, reduction="mean",
                 block_rows=8192, chunk_rows=32):
    """Pallas ordinal loss. predictions: (B,S,K) f32/bf16, targets: (B,S) int."""
    return _ordinal_loss_impl(predictions, targets, reduction=reduction,
                              block_rows=block_rows, chunk_rows=chunk_rows,
                              roll_sign=_roll_shift_sign())


def _ordinal_loss_ref(predictions, targets, reduction="mean"):
    """Pure-JAX reference mirroring the PyTorch forward."""
    B, S, K = predictions.shape
    cum = jnp.cumsum(predictions.astype(jnp.float32), axis=-1)
    loss = jnp.zeros((B, S), jnp.float32)
    for k in range(K - 1):
        leq = (targets <= k).astype(jnp.float32)
        gt = (targets > k).astype(jnp.float32)
        cp = jnp.clip(cum[:, :, k], 1e-8, 1.0 - 1e-8)
        loss = loss - (leq * jnp.log(cp) + gt * jnp.log(1.0 - cp))
    if reduction == "mean":
        return jnp.mean(loss)
    return jnp.sum(loss)


if __name__ == "__main__":
    key = jax.random.PRNGKey(0)

    # Test 1: module-default shapes (n_cats = 4), mean reduction.
    B, S, K = 2, 8, 4
    k1, k2 = jax.random.split(key)
    logits = jax.random.normal(k1, (B, S, K), dtype=jnp.float32)
    predictions = jax.nn.softmax(logits, axis=-1)          # GPCM probabilities
    targets = jax.random.randint(k2, (B, S), 0, K, dtype=jnp.int32)

    loss = jax.block_until_ready(ordinal_loss(predictions, targets, reduction="mean"))
    ref = jax.block_until_ready(_ordinal_loss_ref(predictions, targets, "mean"))
    assert jnp.allclose(loss, ref, rtol=1e-5, atol=1e-5), (loss, ref)

    # Test 2: odd sizes (exercise K->Kp and lane-tail padding) and K=5, sum.
    B2, S2, K2 = 3, 7, 5
    k3, k4 = jax.random.split(k2)
    logits2 = jax.random.normal(k3, (B2, S2, K2), dtype=jnp.float32)
    p2 = jax.nn.softmax(logits2, axis=-1)
    t2 = jax.random.randint(k4, (B2, S2), 0, K2, dtype=jnp.int32)

    loss2 = jax.block_until_ready(ordinal_loss(p2, t2, reduction="sum"))
    ref2 = jax.block_until_ready(_ordinal_loss_ref(p2, t2, "sum"))
    assert jnp.allclose(loss2, ref2, rtol=1e-5, atol=1e-5), (loss2, ref2)

    print("KERNEL_OK")
</pallas_src>

<mosaic_0001>
module attributes {stable_mosaic.version = 11 : i64} {
  func.func @k(%arg0: memref<8x128xf32, #tpu.memory_space<vmem>>, %arg1: memref<8x128xf32, #tpu.memory_space<vmem>>) attributes {dimension_semantics = [], scalar_prefetch = 0 : i64, scratch_operands = 0 : i64, tpu.core_type = #tpu.core_type<tc>} {
    %c0 = arith.constant 0 : index
    %c0_0 = arith.constant 0 : index
    %0 = vector.load %arg0[%c0, %c0_0] : memref<8x128xf32, #tpu.memory_space<vmem>>, vector<8x128xf32>
    %c1_i32 = arith.constant 1 : i32
    %1 = tpu.dynamic_rotate %0 by %c1_i32 dim 1 : vector<8x128xf32>, i32 -> vector<8x128xf32>
    %c0_1 = arith.constant 0 : index
    %c0_2 = arith.constant 0 : index
    %2 = vector.load %arg1[%c0_1, %c0_2] : memref<8x128xf32, #tpu.memory_space<vmem>>, vector<8x128xf32>
    tpu.vector_store %arg1[%c0_1, %c0_2], %1 {strides = array<i32>} : memref<8x128xf32, #tpu.memory_space<vmem>>, vector<8x128xf32>,
    return
  }
}

</mosaic_0001>

<llo_original>
// kernel: tpu_custom_call.1
$region0: #{tpu_custom_call.1}
  #allocation0 [shape = 'u32[]', space=smem, size = 0x4, offset = 0x4, fixed_abs, tag = 'smem constant byte address 0x4 - core index']
  #allocation1 [shape = 'u32[144,128]{1,0:T(1,128)}', space=vmem, size = 0x12000, scoped, tag = 'internal scratch']
  %s0 = inlined_call_operand.hbm [shape: f32[8,128], index: 0, kind: input, shape index: {}]
  %s1 = inlined_call_operand.hbm [shape: f32[8,128], index: 1, kind: output, shape index: {}]
  %s2 = sld [smem:[#allocation0]]
  $region18: #{tpu_custom_call.1} parent=0
    _
  %s4 = ssub.s32 1, %s2
  %s5 = scalar_select 0, %s4, %s2
  $region1: #{tpu_custom_call.1} parent=0
    #allocation2 [shape = 'u8[4096]{0}', space=vmem, size = 0x1000, scoped, tag = 'input window, operand 0, single buffered']
    #allocation3 [shape = 's32[1]{0}', space=sflag, size = 0x4, scoped, tag = 'scoped memory for tpu_custom_call.1']
    #allocation4 [shape = 's32[1]{0}', space=sflag, size = 0x4, scoped, tag = 'scoped memory for tpu_custom_call.1']
    #allocation5 [shape = 'u8[4096]{0}', space=vmem, size = 0x1000, scoped, tag = 'output window, operand 0, single buffered']
    %6 = vsyncpa [#allocation3], 0
    %7 = vsyncpa [#allocation4], 0
    // Predicated region
    $region2: #{tpu_custom_call.1} parent=1 // pred_check
      _
    $region3: #{tpu_custom_call.1} parent=1 // pred_check_branch
      %9 = sbr.rel (0) target = $region5
    $region4: #{tpu_custom_call.1} parent=1 // pred_region
      %s11 = ssub.s32 128, 128
      %12 = vsyncadd [#allocation3], %s11
      %s14 = sshll.u32 [#allocation2], 4
      %s15 = int_to_ptr.vmem [resolvable:$true] %s14
      %17 = dma.hbm_to_vmem [thread:$0]  %s0, 128, %s15, [#allocation3]
    $region5: #{tpu_custom_call.1} parent=1 // pred_fallthru
      _
    // Predicated region
    $region6: #{tpu_custom_call.1} parent=1 // pred_check
      _
    $region7: #{tpu_custom_call.1} parent=1 // pred_check_branch
      %19 = sbr.rel (0) target = $region9
    $region8: #{tpu_custom_call.1} parent=1 // pred_region
      %20 = dma.done [#allocation3], 128
    $region9: #{tpu_custom_call.1} parent=1 // pred_fallthru
      _
    %v21 = vld [vmem:[#allocation2] sm:$0xff]
    %22 = vrot.lane.b32.xlu0 %v21, 1
    %v23 = vpop.permute.xlu0 %22
    %24 = vst [vmem:[#allocation5] sm:$0xff] %v23
    // Predicated region
    $region10: #{tpu_custom_call.1} parent=1 // pred_check
      _
    $region11: #{tpu_custom_call.1} parent=1 // pred_check_branch
      %26 = sbr.rel (0) target = $region13
    $region12: #{tpu_custom_call.1} parent=1 // pred_region
      %s28 = ssub.s32 128, 128
      %29 = vsyncadd [#allocation4], %s28
      %s31 = sshll.u32 [#allocation5], 4
      %s32 = int_to_ptr.vmem [resolvable:$true] %s31
      %34 = dma.vmem_to_hbm [thread:$0]  %s32, 128, %s1, [#allocation4]
    $region13: #{tpu_custom_call.1} parent=1 // pred_fallthru
      _
    // Predicated region
    $region14: #{tpu_custom_call.1} parent=1 // pred_check
      _
    $region15: #{tpu_custom_call.1} parent=1 // pred_check_branch
      %36 = sbr.rel (0) target = $region17
    $region16: #{tpu_custom_call.1} parent=1 // pred_region
      %37 = dma.done [#allocation4], 128
    $region17: #{tpu_custom_call.1} parent=1 // pred_fallthru
      _
    %38 = vsyncpa [#allocation3], 1
    %39 = vsyncpa [#allocation4], 1

</llo_original>
